<compile_context>
chip_gen: v7x
topology: tpu7x:2x2x1
jax: 0.10.0
libtpu: 0.0.40
codegen_flags: <defaults>
</compile_context>

<pallas_src>
import jax
import jax.numpy as jnp
import numpy as np
from jax import lax
from jax.experimental import pallas as pl
from jax.experimental.pallas import tpu as pltpu


def _make_kernel(K, dilation, pad, L_tile, identity_residual):
    d = dilation
    Lh1 = L_tile + pad                    # conv1 outputs incl. left halo for conv2

    def body(x_ref, w1_ref, b1_ref, w2_ref, b2_ref, wd_ref, bd_ref, o_ref):
        x = x_ref[...]                    # (C_in, L_tile + 2*pad), f32
        xb = x.astype(jnp.bfloat16)       # single cast, reused by all conv1 taps

        # ---- conv1: fold K dilated taps into one MXU contraction -----------
        taps1 = [xb[:, k * d:k * d + Lh1] for k in range(K)]
        stk1 = taps1[0] if K == 1 else jnp.concatenate(taps1, axis=0)
        h1 = jnp.dot(w1_ref[...], stk1,
                     preferred_element_type=jnp.float32) + b1_ref[...]
        h1 = jnp.maximum(h1, 0.0)         # (C_out, Lh1) f32; dropout == identity

        # Causal boundary: conv2's left context at the start of the *sequence*
        # is exact zeros (PyTorch zero-pads conv1's chomped output), so zero
        # the halo columns that fall before global position 0 (L-tile 0 only).
        if pad > 0:
            t = pl.program_id(1)
            lane = lax.broadcasted_iota(jnp.int32, h1.shape, 1)
            h1 = jnp.where(lane >= pad - t * L_tile, h1, 0.0)
        h1b = h1.astype(jnp.bfloat16)     # cast once, before tap slicing

        # ---- conv2: same single-matmul fold over K dilated taps of h1 ------
        taps2 = [h1b[:, k * d:k * d + L_tile] for k in range(K)]
        stk2 = taps2[0] if K == 1 else jnp.concatenate(taps2, axis=0)
        h2 = jnp.dot(w2_ref[...], stk2,
                     preferred_element_type=jnp.float32) + b2_ref[...]
        h2 = jnp.maximum(h2, 0.0)         # (C_out, L_tile)

        # ---- residual (identity or 1x1 downsample conv) + final ReLU -------
        x_res = x[:, 2 * pad:2 * pad + L_tile]       # x at this tile's outputs
        if identity_residual:
            res = x_res                               # static skip of the matmul
        else:
            res = jnp.dot(wd_ref[...], x_res.astype(jnp.bfloat16),
                          preferred_element_type=jnp.float32) + bd_ref[...]
        o_ref[...] = jnp.maximum(h2 + res, 0.0).astype(o_ref.dtype)

    if identity_residual:
        def kernel(x_ref, w1_ref, b1_ref, w2_ref, b2_ref, o_ref):
            body(x_ref, w1_ref, b1_ref, w2_ref, b2_ref, None, None, o_ref)
        return kernel
    return body


def tcn_single_block_forward(x, params, *, kernel_size, dilation=1):
    w1, b1, w2, b2, wd, bd = params
    N, C_in, L = x.shape
    C_out = w1.shape[0]
    K = kernel_size
    pad = (K - 1) * dilation
    identity_residual = (C_in == C_out)

    # ---- L tiling: lane-dense multiples of 128 (unmasked output stores),
    # capped at 512 columns/tile.  Each tile carries a 2*pad left halo so both
    # stacked causal convs are computable locally (halo region recomputed).
    LANE = 128
    L128 = -(-L // LANE) * LANE
    if L128 <= 512:
        L_tile, T = L128, 1
    else:
        T = -(-L128 // 512)
        L_tile = LANE * (-(-(L128 // LANE) // T))
    L_padded = T * L_tile
    Lh = L_tile + 2 * pad

    # Plain-JAX glue: causal left halo + right pad up to whole tiles, then an
    # explicit overlapping-tile view (N, T, C_in, L_tile + 2*pad).
    x_p = jnp.pad(x, ((0, 0), (0, 0), (2 * pad, L_padded - L)))
    if T == 1:
        x_tiles = x_p[:, None]
    else:
        starts = jnp.arange(T) * L_tile
        x_tiles = jax.vmap(
            lambda s: lax.dynamic_slice_in_dim(x_p, s, Lh, axis=2),
            out_axes=1)(starts)

    # Per-tap weights flattened to one (C_out, K*C) contraction, bf16 for the
    # MXU; biases stay f32 (f32 accumulate + epilogue in-kernel).
    w1f = jnp.transpose(w1, (0, 2, 1)).reshape(C_out, K * C_in).astype(jnp.bfloat16)
    w2f = jnp.transpose(w2, (0, 2, 1)).reshape(C_out, K * C_out).astype(jnp.bfloat16)
    b1c = b1.reshape(C_out, 1).astype(jnp.float32)
    b2c = b2.reshape(C_out, 1).astype(jnp.float32)

    operands = [x_tiles, w1f, b1c, w2f, b2c]
    in_specs = [
        pl.BlockSpec((None, None, C_in, Lh), lambda n, t: (n, t, 0, 0)),
        pl.BlockSpec((C_out, K * C_in), lambda n, t: (0, 0)),
        pl.BlockSpec((C_out, 1), lambda n, t: (0, 0)),
        pl.BlockSpec((C_out, K * C_out), lambda n, t: (0, 0)),
        pl.BlockSpec((C_out, 1), lambda n, t: (0, 0)),
    ]
    if not identity_residual:
        wdb = wd.astype(jnp.bfloat16)
        bdc = bd.reshape(C_out, 1).astype(jnp.float32)
        operands += [wdb, bdc]
        in_specs += [pl.BlockSpec((C_out, C_in), lambda n, t: (0, 0)),
                     pl.BlockSpec((C_out, 1), lambda n, t: (0, 0))]

    kernel = _make_kernel(K, dilation, pad, L_tile, identity_residual)

    # Explicit VMEM budget (double-buffered in/out tiles + weights + live
    # values) with headroom, capped at 64 MiB so it is valid on v7x as well.
    f32b, bf16b = 4, 2
    w_bytes = (w1f.size + w2f.size + (0 if identity_residual else C_in * C_out)) * bf16b
    need = (2 * (C_in * Lh + C_out * L_tile) * f32b
            + 2 * w_bytes
            + 8 * C_out * (L_tile + pad) * f32b)
    vmem_limit = int(min(max(4 * need, 16 * 1024 * 1024), 64 * 1024 * 1024))

    flops = 2 * N * T * (K * C_in * C_out * (L_tile + pad)
                         + K * C_out * C_out * L_tile
                         + (0 if identity_residual else C_in * C_out * L_tile))
    bytes_accessed = int(x_tiles.size * f32b + N * C_out * L_padded * f32b
                         + w_bytes + 3 * C_out * f32b)
    cost = pl.CostEstimate(flops=int(flops), transcendentals=0,
                           bytes_accessed=bytes_accessed)

    out = pl.pallas_call(
        kernel,
        out_shape=jax.ShapeDtypeStruct((N, C_out, L_padded), x.dtype),
        grid_spec=pltpu.PrefetchScalarGridSpec(
            num_scalar_prefetch=0,
            grid=(N, T),
            in_specs=in_specs,
            out_specs=pl.BlockSpec((None, C_out, L_tile), lambda n, t: (n, 0, t)),
        ),
        compiler_params=pltpu.CompilerParams(
            dimension_semantics=("parallel", "parallel"),
            vmem_limit_bytes=vmem_limit),
        cost_estimate=cost,
    )(*operands)
    return out[:, :, :L]


def init_params(key, in_channels, out_channels, kernel_size):
    # TCN init_weights: conv weights ~ N(0, 0.01); weight_norm folded in.
    k1, k2, k3, k4, k5, k6 = jax.random.split(key, 6)
    w1 = 0.01 * jax.random.normal(k1, (out_channels, in_channels, kernel_size), jnp.float32)
    b1 = 0.01 * jax.random.normal(k2, (out_channels,), jnp.float32)
    w2 = 0.01 * jax.random.normal(k3, (out_channels, out_channels, kernel_size), jnp.float32)
    b2 = 0.01 * jax.random.normal(k4, (out_channels,), jnp.float32)
    if in_channels != out_channels:
        wd = 0.01 * jax.random.normal(k5, (out_channels, in_channels), jnp.float32)
        bd = 0.01 * jax.random.normal(k6, (out_channels,), jnp.float32)
    else:
        # no downsample in the PyTorch block -> identity residual
        wd = jnp.eye(out_channels, dtype=jnp.float32)
        bd = jnp.zeros((out_channels,), jnp.float32)
    return (w1, b1, w2, b2, wd, bd)


def ref_forward(x, params, *, kernel_size, dilation=1):
    # Pure-JAX reference of the same TCN single block (eval mode).
    w1, b1, w2, b2, wd, bd = params
    pad = (kernel_size - 1) * dilation
    dn = ('NCH', 'OIH', 'NCH')

    def causal_conv(h, w, b):
        y = lax.conv_general_dilated(h, w, window_strides=(1,),
                                     padding=[(pad, 0)], rhs_dilation=(dilation,),
                                     dimension_numbers=dn)
        return y + b[None, :, None]

    h1 = jnp.maximum(causal_conv(x, w1, b1), 0.0)
    h2 = jnp.maximum(causal_conv(h1, w2, b2), 0.0)
    res = jnp.einsum('oc,ncl->nol', wd, x) + bd[None, :, None]
    return jnp.maximum(h2 + res, 0.0)


if __name__ == "__main__":
    key = jax.random.PRNGKey(0)

    def run_case(case_key, N, C_in, C_out, K, dilation, L):
        kx, kp = jax.random.split(case_key)
        x = jax.random.normal(kx, (N, C_in, L), jnp.float32)
        params = init_params(kp, C_in, C_out, K)
        out = tcn_single_block_forward(x, params, kernel_size=K, dilation=dilation)
        out = jax.block_until_ready(out)
        ref = ref_forward(x, params, kernel_size=K, dilation=dilation)
        # bf16 MXU matmuls with f32 accumulation -> slightly looser tolerance.
        np.testing.assert_allclose(np.asarray(out), np.asarray(ref),
                                   rtol=5e-2, atol=5e-3)

    k1, k2, k3 = jax.random.split(key, 3)
    # tcn_single_block(in_channels=4, out_channels=8, kernel_size=3, dropout=0.2)
    run_case(k1, N=2, C_in=4, C_out=8, K=3, dilation=1, L=16)
    # identity-residual path (in_channels == out_channels: matmul statically skipped)
    run_case(k2, N=2, C_in=8, C_out=8, K=2, dilation=1, L=12)
    # multi-tile path (L > 512): exercises halo recompute + tile-0 causal mask
    run_case(k3, N=1, C_in=4, C_out=8, K=3, dilation=2, L=700)

    print("KERNEL_OK")
</pallas_src>

<mosaic_0001>
module attributes {stable_mosaic.version = 11 : i64} {
  func.func @body(%arg0: i32, %arg1: i32, %arg2: memref<1x1x4x132xf32, #tpu.memory_space<vmem>>, %arg3: memref<8x12xbf16, #tpu.memory_space<vmem>>, %arg4: memref<8x1xf32, #tpu.memory_space<vmem>>, %arg5: memref<8x24xbf16, #tpu.memory_space<vmem>>, %arg6: memref<8x1xf32, #tpu.memory_space<vmem>>, %arg7: memref<8x4xbf16, #tpu.memory_space<vmem>>, %arg8: memref<8x1xf32, #tpu.memory_space<vmem>>, %arg9: memref<1x8x128xf32, #tpu.memory_space<vmem>>) attributes {dimension_semantics = [#tpu.dimension_semantics<parallel>, #tpu.dimension_semantics<parallel>], iteration_bounds = array<i64: 2, 1>, scalar_prefetch = 0 : i64, scratch_operands = 0 : i64, tpu.core_type = #tpu.core_type<tc>, window_params = [{transform_indices = @transform_0, window_bounds = array<i64: 1, 1, 4, 132>}, {pipeline_mode = #tpu.pipeline_mode<synchronous>, transform_indices = @transform_1, window_bounds = array<i64: 8, 12>}, {pipeline_mode = #tpu.pipeline_mode<synchronous>, transform_indices = @transform_2, window_bounds = array<i64: 8, 1>}, {pipeline_mode = #tpu.pipeline_mode<synchronous>, transform_indices = @transform_3, window_bounds = array<i64: 8, 24>}, {pipeline_mode = #tpu.pipeline_mode<synchronous>, transform_indices = @transform_4, window_bounds = array<i64: 8, 1>}, {pipeline_mode = #tpu.pipeline_mode<synchronous>, transform_indices = @transform_5, window_bounds = array<i64: 8, 4>}, {pipeline_mode = #tpu.pipeline_mode<synchronous>, transform_indices = @transform_6, window_bounds = array<i64: 8, 1>}, {transform_indices = @transform_7, window_bounds = array<i64: 1, 8, 128>}]} {
    %c0 = arith.constant 0 : index
    %c0_0 = arith.constant 0 : index
    %c0_1 = arith.constant 0 : index
    %c0_2 = arith.constant 0 : index
    %0 = vector.load %arg2[%c0, %c0_0, %c0_1, %c0_2] : memref<1x1x4x132xf32, #tpu.memory_space<vmem>>, vector<1x1x4x132xf32>
    %1 = vector.shape_cast %0 : vector<1x1x4x132xf32> to vector<4x132xf32>
    %2 = arith.truncf %1 : vector<4x132xf32> to vector<4x132xbf16>
    %3 = vector.extract_strided_slice %2 {offsets = [0, 0], sizes = [4, 130], strides = [1, 1]} : vector<4x132xbf16> to vector<4x130xbf16>
    %4 = vector.extract_strided_slice %2 {offsets = [0, 1], sizes = [4, 130], strides = [1, 1]} : vector<4x132xbf16> to vector<4x130xbf16>
    %5 = vector.extract_strided_slice %2 {offsets = [0, 2], sizes = [4, 130], strides = [1, 1]} : vector<4x132xbf16> to vector<4x130xbf16>
    %6 = tpu.concatenate %3, %4, %5 in 0 : vector<4x130xbf16>, vector<4x130xbf16>, vector<4x130xbf16> -> vector<12x130xbf16>
    %c0_3 = arith.constant 0 : index
    %c0_4 = arith.constant 0 : index
    %7 = vector.load %arg3[%c0_3, %c0_4] : memref<8x12xbf16, #tpu.memory_space<vmem>>, vector<8x12xbf16>
    %cst = arith.constant dense<0.000000e+00> : vector<8x130xf32>
    %8 = tpu.matmul %7, %6, %cst {dimension_numbers = #tpu.dot_dimension_numbers<[1], [0], [0], [1], [0, 0, 1, 1], [], []>} : vector<8x12xbf16>, vector<12x130xbf16>, vector<8x130xf32> -> vector<8x130xf32>
    %c0_5 = arith.constant 0 : index
    %c0_6 = arith.constant 0 : index
    %9 = vector.load %arg4[%c0_5, %c0_6] : memref<8x1xf32, #tpu.memory_space<vmem>>, vector<8x1xf32>
    %10 = vector.broadcast %9 : vector<8x1xf32> to vector<8x130xf32>
    %11 = arith.addf %8, %10 : vector<8x130xf32>
    %cst_7 = arith.constant 0.000000e+00 : f32
    %12 = vector.broadcast %cst_7 : f32 to vector<8x130xf32>
    %13 = arith.maximumf %11, %12 : vector<8x130xf32>
    %14 = tpu.iota {dimensions = array<i32: 1>} : vector<8x130xi32>
    %c128_i32 = arith.constant 128 : i32
    %15 = arith.muli %arg1, %c128_i32 : i32
    %c2_i32 = arith.constant 2 : i32
    %16 = arith.subi %c2_i32, %15 : i32
    %17 = vector.broadcast %16 : i32 to vector<8x130xi32>
    %18 = arith.cmpi sge, %14, %17 : vector<8x130xi32>
    %cst_8 = arith.constant 0.000000e+00 : f32
    %19 = vector.broadcast %cst_8 : f32 to vector<8x130xf32>
    %20 = arith.select %18, %13, %19 : vector<8x130xi1>, vector<8x130xf32>
    %21 = arith.truncf %20 : vector<8x130xf32> to vector<8x130xbf16>
    %22 = vector.extract_strided_slice %21 {offsets = [0, 0], sizes = [8, 128], strides = [1, 1]} : vector<8x130xbf16> to vector<8x128xbf16>
    %23 = vector.extract_strided_slice %21 {offsets = [0, 1], sizes = [8, 128], strides = [1, 1]} : vector<8x130xbf16> to vector<8x128xbf16>
    %24 = vector.extract_strided_slice %21 {offsets = [0, 2], sizes = [8, 128], strides = [1, 1]} : vector<8x130xbf16> to vector<8x128xbf16>
    %25 = tpu.concatenate %22, %23, %24 in 0 : vector<8x128xbf16>, vector<8x128xbf16>, vector<8x128xbf16> -> vector<24x128xbf16>
    %c0_9 = arith.constant 0 : index
    %c0_10 = arith.constant 0 : index
    %26 = vector.load %arg5[%c0_9, %c0_10] : memref<8x24xbf16, #tpu.memory_space<vmem>>, vector<8x24xbf16>
    %cst_11 = arith.constant dense<0.000000e+00> : vector<8x128xf32>
    %27 = tpu.matmul %26, %25, %cst_11 {dimension_numbers = #tpu.dot_dimension_numbers<[1], [0], [0], [1], [0, 0, 1, 1], [], []>} : vector<8x24xbf16>, vector<24x128xbf16>, vector<8x128xf32> -> vector<8x128xf32>
    %c0_12 = arith.constant 0 : index
    %c0_13 = arith.constant 0 : index
    %28 = vector.load %arg6[%c0_12, %c0_13] : memref<8x1xf32, #tpu.memory_space<vmem>>, vector<8x1xf32>
    %29 = vector.broadcast %28 : vector<8x1xf32> to vector<8x128xf32>
    %30 = arith.addf %27, %29 : vector<8x128xf32>
    %cst_14 = arith.constant 0.000000e+00 : f32
    %31 = vector.broadcast %cst_14 : f32 to vector<8x128xf32>
    %32 = arith.maximumf %30, %31 : vector<8x128xf32>
    %33 = vector.extract_strided_slice %1 {offsets = [0, 4], sizes = [4, 128], strides = [1, 1]} : vector<4x132xf32> to vector<4x128xf32>
    %c0_15 = arith.constant 0 : index
    %c0_16 = arith.constant 0 : index
    %34 = vector.load %arg7[%c0_15, %c0_16] : memref<8x4xbf16, #tpu.memory_space<vmem>>, vector<8x4xbf16>
    %35 = arith.truncf %33 : vector<4x128xf32> to vector<4x128xbf16>
    %cst_17 = arith.constant dense<0.000000e+00> : vector<8x128xf32>
    %36 = tpu.matmul %34, %35, %cst_17 {dimension_numbers = #tpu.dot_dimension_numbers<[1], [0], [0], [1], [0, 0, 1, 1], [], []>} : vector<8x4xbf16>, vector<4x128xbf16>, vector<8x128xf32> -> vector<8x128xf32>
    %c0_18 = arith.constant 0 : index
    %c0_19 = arith.constant 0 : index
    %37 = vector.load %arg8[%c0_18, %c0_19] : memref<8x1xf32, #tpu.memory_space<vmem>>, vector<8x1xf32>
    %38 = vector.broadcast %37 : vector<8x1xf32> to vector<8x128xf32>
    %39 = arith.addf %36, %38 : vector<8x128xf32>
    %40 = arith.addf %32, %39 : vector<8x128xf32>
    %cst_20 = arith.constant 0.000000e+00 : f32
    %41 = vector.broadcast %cst_20 : f32 to vector<8x128xf32>
    %42 = arith.maximumf %40, %41 : vector<8x128xf32>
    %c0_21 = arith.constant 0 : index
    %c0_22 = arith.constant 0 : index
    %c0_23 = arith.constant 0 : index
    %43 = vector.load %arg9[%c0_21, %c0_22, %c0_23] : memref<1x8x128xf32, #tpu.memory_space<vmem>>, vector<1x8x128xf32>
    %44 = vector.shape_cast %43 : vector<1x8x128xf32> to vector<8x128xf32>
    %45 = vector.shape_cast %42 : vector<8x128xf32> to vector<1x8x128xf32>
    tpu.vector_store %arg9[%c0_21, %c0_22, %c0_23], %45 {strides = array<i32>} : memref<1x8x128xf32, #tpu.memory_space<vmem>>, vector<1x8x128xf32>,
    return
  }
  func.func @transform_0(%arg0: i32, %arg1: i32) -> (i32, i32, i32, i32) {
    %c0_i32 = arith.constant 0 : i32
    %c0_i32_0 = arith.constant 0 : i32
    %c0_i32_1 = arith.constant 0 : i32
    return %arg0, %arg1, %c0_i32, %c0_i32_0 : i32, i32, i32, i32
  }
  func.func @transform_1(%arg0: i32, %arg1: i32) -> (i32, i32) {
    %c0_i32 = arith.constant 0 : i32
    %c0_i32_0 = arith.constant 0 : i32
    %c0_i32_1 = arith.constant 0 : i32
    return %c0_i32, %c0_i32_0 : i32, i32
  }
  func.func @transform_2(%arg0: i32, %arg1: i32) -> (i32, i32) {
    %c0_i32 = arith.constant 0 : i32
    %c0_i32_0 = arith.constant 0 : i32
    %c0_i32_1 = arith.constant 0 : i32
    return %c0_i32, %c0_i32_0 : i32, i32
  }
  func.func @transform_3(%arg0: i32, %arg1: i32) -> (i32, i32) {
    %c0_i32 = arith.constant 0 : i32
    %c0_i32_0 = arith.constant 0 : i32
    %c0_i32_1 = arith.constant 0 : i32
    return %c0_i32, %c0_i32_0 : i32, i32
  }
  func.func @transform_4(%arg0: i32, %arg1: i32) -> (i32, i32) {
    %c0_i32 = arith.constant 0 : i32
    %c0_i32_0 = arith.constant 0 : i32
    %c0_i32_1 = arith.constant 0 : i32
    return %c0_i32, %c0_i32_0 : i32, i32
  }
  func.func @transform_5(%arg0: i32, %arg1: i32) -> (i32, i32) {
    %c0_i32 = arith.constant 0 : i32
    %c0_i32_0 = arith.constant 0 : i32
    %c0_i32_1 = arith.constant 0 : i32
    return %c0_i32, %c0_i32_0 : i32, i32
  }
  func.func @transform_6(%arg0: i32, %arg1: i32) -> (i32, i32) {
    %c0_i32 = arith.constant 0 : i32
    %c0_i32_0 = arith.constant 0 : i32
    %c0_i32_1 = arith.constant 0 : i32
    return %c0_i32, %c0_i32_0 : i32, i32
  }
  func.func @transform_7(%arg0: i32, %arg1: i32) -> (i32, i32, i32) {
    %c0_i32 = arith.constant 0 : i32
    %c0_i32_0 = arith.constant 0 : i32
    return %arg0, %c0_i32, %arg1 : i32, i32, i32
  }
}

</mosaic_0001>

<llo_original>
// kernel: tpu_custom_call.1
$region0: #{tpu_custom_call.1}
  #allocation0 [shape = 'u32[]', space=smem, size = 0x4, offset = 0x4, fixed_abs, tag = 'smem constant byte address 0x4 - core index']
  #allocation1 [shape = 'u32[144,128]{1,0:T(1,128)}', space=vmem, size = 0x12000, scoped, tag = 'internal scratch']
  %s0 = inlined_call_operand.vmem [shape: f32[2,1,4,132], index: 0, kind: input, shape index: {}]
  %s1 = inlined_call_operand.vmem [shape: bf16[8,12], index: 1, kind: input, shape index: {}]
  %s2 = inlined_call_operand.vmem [shape: f32[8,1], index: 2, kind: input, shape index: {}]
  %s3 = inlined_call_operand.vmem [shape: bf16[8,24], index: 3, kind: input, shape index: {}]
  %s4 = inlined_call_operand.vmem [shape: f32[8,1], index: 4, kind: input, shape index: {}]
  %s5 = inlined_call_operand.vmem [shape: bf16[8,4], index: 5, kind: input, shape index: {}]
  %s6 = inlined_call_operand.vmem [shape: f32[8,1], index: 6, kind: input, shape index: {}]
  %s7 = inlined_call_operand.hbm [shape: f32[2,8,128], index: 7, kind: output, shape index: {}]
  %s8 = sld [smem:[#allocation0]]
  $region61: #{tpu_custom_call.1} parent=0
    _
  %s10 = ssub.s32 1, %s8
  %s11 = scalar_select 0, %s10, %s8
  $region1: #{tpu_custom_call.1} parent=0
    #allocation2 [shape = 'u8[8192]{0}', space=vmem, size = 0x2000, scoped, tag = 'output window, operand 0']
    #allocation3 [shape = 's32[2]{0}', space=sflag, size = 0x8, scoped, tag = 'scoped memory for tpu_custom_call.1']
    %12 = vsyncpa [#allocation3], 0
    %s13 = scalar_lea.sflag [#allocation3], 1
    %14 = vsyncpa %s13, 0
    loop: start=0, step=1, limit=4
    $region2: #{tpu_custom_call.1} parent=1 // loop_pre_header
      _
    $region3: #{tpu_custom_call.1} parent=1 // loop_header
      %s16 = sphi 0, %s20
      %p17 = scmp.ge.s32.totalorder %s16, 4
      %s23 = sphi 0, %s35
      %s24 = sphi 0, %s31
      %s25 = sphi 0, %s23
      %s26 = sphi 0, %s24
      %s27 = sphi 0, %s25
      %s28 = sphi 0, %s26
      %s40 = sphi 0, %s42
      %s43 = sphi 0, %s40
      %s44 = sphi 0, %s43
      %s60 = sphi 0, %s44
      %s64 = sphi 0, %s64
      %s66 = sphi 0, %s64
      %s67 = sphi 0, %s66
      %s81 = sphi 0, %s67
      %s85 = sphi 0, %s85
      %s87 = sphi 0, %s85
      %s88 = sphi 0, %s87
      %s102 = sphi 0, %s88
      %s106 = sphi 0, %s106
      %s108 = sphi 0, %s106
      %s109 = sphi 0, %s108
      %s123 = sphi 0, %s109
      %s127 = sphi 0, %s127
      %s129 = sphi 0, %s127
      %s130 = sphi 0, %s129
      %s144 = sphi 0, %s130
      %s148 = sphi 0, %s148
      %s150 = sphi 0, %s148
      %s151 = sphi 0, %s150
      %s165 = sphi 0, %s151
      %s169 = sphi 0, %s169
      %s171 = sphi 0, %s169
      %s172 = sphi 0, %s171
      %s186 = sphi 0, %s172
      %s194 = sphi 0, %s196
      %s197 = sphi 0, %s194
      %s198 = sphi 0, %s197
      %s214 = sphi 0, %s198
    $region4: #{tpu_custom_call.1} parent=1 // loop_header_branch
      %19 = sbr.rel (%p17) target = $region8
    $region5: #{tpu_custom_call.1} parent=1 // loop_body
      %s21 = ssub.s32 %s16, 1
      %s22 = ssub.s32 %s16, 2
      %s29 = sadd.s32 1, %s24
      %p30 = scmp.ge.s32.totalorder %s29, 1
      %s31 = scalar_select %p30, 0, %s29
      %s32 = sadd.s32 1, %s23
      %s33 = scalar_select %p30, %s32, %s23
      %p34 = scmp.ge.s32.totalorder %s33, 2
      %s35 = scalar_select %p34, 0, %s33
      %s36 = ssub.s32 %s23, %s35
      %s37 = ssub.s32 %s24, %s31
      %s38 = sor.u32 %s36, %s37
      %p39 = scmp.eq.s32.totalorder %s38, 0
      %s41 = sadd.s32 %s40, 1
      %s42 = scalar_select %p39, %s40, %s41
      %p45 = pneg %p39
      %p46 = scmp.eq.s32.totalorder %s16, 1
      %p47 = por %p45, %p46
      %p48 = scmp.ne.s32.totalorder %s40, %s43
      %p49 = scmp.eq.s32.totalorder %s16, 0
      %p50 = por %p48, %p49
      %p51 = scmp.ne.s32.totalorder %s40, %s43
      %p52 = scmp.eq.s32.totalorder %s21, 1
      %p53 = por %p51, %p52
      %p54 = scmp.ne.s32.totalorder %s43, %s44
      %p55 = scmp.eq.s32.totalorder %s21, 0
      %p56 = por %p54, %p55
      %p57 = scmp.ne.s32.totalorder %s43, %s44
      %p58 = scmp.eq.s32.totalorder %s22, 1
      %p59 = por %p57, %p58
      %p61 = scmp.ne.s32.totalorder %s44, %s60
      %p62 = scmp.eq.s32.totalorder %s22, 0
      %p63 = por %p61, %p62
      %s65 = sadd.s32 %s64, 1
      %p68 = scmp.eq.s32.totalorder %s16, 1
      %p69 = scmp.ne.s32.totalorder %s64, %s66
      %p70 = scmp.eq.s32.totalorder %s16, 0
      %p71 = por %p69, %p70
      %p72 = scmp.ne.s32.totalorder %s64, %s66
      %p73 = scmp.eq.s32.totalorder %s21, 1
      %p74 = por %p72, %p73
      %p75 = scmp.ne.s32.totalorder %s66, %s67
      %p76 = scmp.eq.s32.totalorder %s21, 0
      %p77 = por %p75, %p76
      %p78 = scmp.ne.s32.totalorder %s66, %s67
      %p79 = scmp.eq.s32.totalorder %s22, 1
      %p80 = por %p78, %p79
      %p82 = scmp.ne.s32.totalorder %s67, %s81
      %p83 = scmp.eq.s32.totalorder %s22, 0
      %p84 = por %p82, %p83
      %s86 = sadd.s32 %s85, 1
      %p89 = scmp.eq.s32.totalorder %s16, 1
      %p90 = scmp.ne.s32.totalorder %s85, %s87
      %p91 = scmp.eq.s32.totalorder %s16, 0
      %p92 = por %p90, %p91
      %p93 = scmp.ne.s32.totalorder %s85, %s87
      %p94 = scmp.eq.s32.totalorder %s21, 1
      %p95 = por %p93, %p94
      %p96 = scmp.ne.s32.totalorder %s87, %s88
      %p97 = scmp.eq.s32.totalorder %s21, 0
      %p98 = por %p96, %p97
      %p99 = scmp.ne.s32.totalorder %s87, %s88
      %p100 = scmp.eq.s32.totalorder %s22, 1
      %p101 = por %p99, %p100
      %p103 = scmp.ne.s32.totalorder %s88, %s102
      %p104 = scmp.eq.s32.totalorder %s22, 0
      %p105 = por %p103, %p104
      %s107 = sadd.s32 %s106, 1
      %p110 = scmp.eq.s32.totalorder %s16, 1
      %p111 = scmp.ne.s32.totalorder %s106, %s108
      %p112 = scmp.eq.s32.totalorder %s16, 0
      %p113 = por %p111, %p112
      %p114 = scmp.ne.s32.totalorder %s106, %s108
      %p115 = scmp.eq.s32.totalorder %s21, 1
      %p116 = por %p114, %p115
      %p117 = scmp.ne.s32.totalorder %s108, %s109
      %p118 = scmp.eq.s32.totalorder %s21, 0
      %p119 = por %p117, %p118
      %p120 = scmp.ne.s32.totalorder %s108, %s109
      %p121 = scmp.eq.s32.totalorder %s22, 1
      %p122 = por %p120, %p121
      %p124 = scmp.ne.s32.totalorder %s109, %s123
      %p125 = scmp.eq.s32.totalorder %s22, 0
      %p126 = por %p124, %p125
      %s128 = sadd.s32 %s127, 1
      %p131 = scmp.eq.s32.totalorder %s16, 1
      %p132 = scmp.ne.s32.totalorder %s127, %s129
      %p133 = scmp.eq.s32.totalorder %s16, 0
      %p134 = por %p132, %p133
      %p135 = scmp.ne.s32.totalorder %s127, %s129
      %p136 = scmp.eq.s32.totalorder %s21, 1
      %p137 = por %p135, %p136
      %p138 = scmp.ne.s32.totalorder %s129, %s130
      %p139 = scmp.eq.s32.totalorder %s21, 0
      %p140 = por %p138, %p139
      %p141 = scmp.ne.s32.totalorder %s129, %s130
      %p142 = scmp.eq.s32.totalorder %s22, 1
      %p143 = por %p141, %p142
      %p145 = scmp.ne.s32.totalorder %s130, %s144
      %p146 = scmp.eq.s32.totalorder %s22, 0
      %p147 = por %p145, %p146
      %s149 = sadd.s32 %s148, 1
      %p152 = scmp.eq.s32.totalorder %s16, 1
      %p153 = scmp.ne.s32.totalorder %s148, %s150
      %p154 = scmp.eq.s32.totalorder %s16, 0
      %p155 = por %p153, %p154
      %p156 = scmp.ne.s32.totalorder %s148, %s150
      %p157 = scmp.eq.s32.totalorder %s21, 1
      %p158 = por %p156, %p157
      %p159 = scmp.ne.s32.totalorder %s150, %s151
      %p160 = scmp.eq.s32.totalorder %s21, 0
      %p161 = por %p159, %p160
      %p162 = scmp.ne.s32.totalorder %s150, %s151
      %p163 = scmp.eq.s32.totalorder %s22, 1
      %p164 = por %p162, %p163
      %p166 = scmp.ne.s32.totalorder %s151, %s165
      %p167 = scmp.eq.s32.totalorder %s22, 0
      %p168 = por %p166, %p167
      %s170 = sadd.s32 %s169, 1
      %p173 = scmp.eq.s32.totalorder %s16, 1
      %p174 = scmp.ne.s32.totalorder %s169, %s171
      %p175 = scmp.eq.s32.totalorder %s16, 0
      %p176 = por %p174, %p175
      %p177 = scmp.ne.s32.totalorder %s169, %s171
      %p178 = scmp.eq.s32.totalorder %s21, 1
      %p179 = por %p177, %p178
      %p180 = scmp.ne.s32.totalorder %s171, %s172
      %p181 = scmp.eq.s32.totalorder %s21, 0
      %p182 = por %p180, %p181
      %p183 = scmp.ne.s32.totalorder %s171, %s172
      %p184 = scmp.eq.s32.totalorder %s22, 1
      %p185 = por %p183, %p184
      %p187 = scmp.ne.s32.totalorder %s172, %s186
      %p188 = scmp.eq.s32.totalorder %s22, 0
      %p189 = por %p187, %p188
      %s190 = ssub.s32 %s23, %s35
      %s191 = ssub.s32 %s24, %s31
      %s192 = sor.u32 %s190, %s191
      %p193 = scmp.eq.s32.totalorder %s192, 0
      %s195 = sadd.s32 %s194, 1
      %s196 = scalar_select %p193, %s194, %s195
      %p199 = pneg %p193
      %p200 = scmp.eq.s32.totalorder %s16, 1
      %p201 = por %p199, %p200
      %p202 = scmp.ne.s32.totalorder %s194, %s197
      %p203 = scmp.eq.s32.totalorder %s16, 0
      %p204 = por %p202, %p203
      %p205 = scmp.ne.s32.totalorder %s194, %s197
      %p206 = scmp.eq.s32.totalorder %s21, 1
      %p207 = por %p205, %p206
      %p208 = scmp.ne.s32.totalorder %s197, %s198
      %p209 = scmp.eq.s32.totalorder %s21, 0
      %p210 = por %p208, %p209
      %p211 = scmp.ne.s32.totalorder %s197, %s198
      %p212 = scmp.eq.s32.totalorder %s22, 1
      %p213 = por %p211, %p212
      %p215 = scmp.ne.s32.totalorder %s198, %s214
      %p216 = scmp.eq.s32.totalorder %s22, 0
      %p217 = por %p215, %p216
      %p218 = scmp.le.s32.totalorder 1, %s16
      %p219 = scmp.lt.s32.totalorder %s16, 3
      %p220 = pnand %p218, %p219
      %p221 = pneg %p220
      // Predicated region
      $region9: #{tpu_custom_call.1} parent=5 // pred_check
        _
      $region10: #{tpu_custom_call.1} parent=5 // pred_check_branch
        %223 = sbr.rel (%p220) target = $region12
      $region11: #{tpu_custom_call.1} parent=5 // pred_region
        %s224 = ssub.s32 %s16, 1
        // Predicated region
        $region13: #{tpu_custom_call.1} parent=11 // pred_check
          %p225 = pneg %p77
        $region14: #{tpu_custom_call.1} parent=11 // pred_check_branch
          %227 = sbr.rel (%p225) target = $region16
        $region15: #{tpu_custom_call.1} parent=11 // pred_region
          _
        $region16: #{tpu_custom_call.1} parent=11 // pred_fallthru
          _
        // Predicated region
        $region17: #{tpu_custom_call.1} parent=11 // pred_check
          %p228 = pneg %p98
        $region18: #{tpu_custom_call.1} parent=11 // pred_check_branch
          %230 = sbr.rel (%p228) target = $region20
        $region19: #{tpu_custom_call.1} parent=11 // pred_region
          _
        $region20: #{tpu_custom_call.1} parent=11 // pred_fallthru
          _
        // Predicated region
        $region21: #{tpu_custom_call.1} parent=11 // pred_check
          %p231 = pneg %p119
        $region22: #{tpu_custom_call.1} parent=11 // pred_check_branch
          %233 = sbr.rel (%p231) target = $region24
        $region23: #{tpu_custom_call.1} parent=11 // pred_region
          _
        $region24: #{tpu_custom_call.1} parent=11 // pred_fallthru
          _
        // Predicated region
        $region25: #{tpu_custom_call.1} parent=11 // pred_check
          %p234 = pneg %p140
        $region26: #{tpu_custom_call.1} parent=11 // pred_check_branch
          %236 = sbr.rel (%p234) target = $region28
        $region27: #{tpu_custom_call.1} parent=11 // pred_region
          _
        $region28: #{tpu_custom_call.1} parent=11 // pred_fallthru
          _
        // Predicated region
        $region29: #{tpu_custom_call.1} parent=11 // pred_check
          %p237 = pneg %p161
        $region30: #{tpu_custom_call.1} parent=11 // pred_check_branch
          %239 = sbr.rel (%p237) target = $region32
        $region31: #{tpu_custom_call.1} parent=11 // pred_region
          _
        $region32: #{tpu_custom_call.1} parent=11 // pred_fallthru
          _
        // Predicated region
        $region33: #{tpu_custom_call.1} parent=11 // pred_check
          %p240 = pneg %p182
        $region34: #{tpu_custom_call.1} parent=11 // pred_check_branch
          %242 = sbr.rel (%p240) target = $region36
        $region35: #{tpu_custom_call.1} parent=11 // pred_region
          _
        $region36: #{tpu_custom_call.1} parent=11 // pred_fallthru
          _
      $region12: #{tpu_custom_call.1} parent=5 // pred_fallthru
        _
      %p243 = scmp.lt.s32.totalorder %s16, 2
      // Predicated region
      $region37: #{tpu_custom_call.1} parent=5 // pred_check
        %p244 = pneg %p243
      $region38: #{tpu_custom_call.1} parent=5 // pred_check_branch
        %246 = sbr.rel (%p244) target = $region40
      $region39: #{tpu_custom_call.1} parent=5 // pred_region
        // Predicated region
        $region41: #{tpu_custom_call.1} parent=39 // pred_check
          %p247 = pneg %p50
        $region42: #{tpu_custom_call.1} parent=39 // pred_check_branch
          %249 = sbr.rel (%p247) target = $region44
        $region43: #{tpu_custom_call.1} parent=39 // pred_region
          %p250 = scmp.lt.s32.totalorder %s23, 1
          %s251 = scalar_select %p250, %s23, 1
          %p252 = scmp.lt.s32.totalorder %s24, 0
          %s253 = scalar_select %p252, %s24, 0
          %s254 = smul.addr %s253, 2
          %s255 = smul.addr %s251, 2
          %s256 = sadd.s32 %s254, %s255
          %s257 = smul.addr %s256, 4
          %s258 = scalar_lea.vmem %s0, %s257
        $region44: #{tpu_custom_call.1} parent=39 // pred_fallthru
          _
      $region40: #{tpu_custom_call.1} parent=5 // pred_fallthru
        _
      %p259 = scmp.le.s32.totalorder 1, %s16
      %p260 = scmp.lt.s32.totalorder %s16, 3
      %p261 = pnand %p259, %p260
      %p262 = pneg %p261
      // Predicated region
      $region45: #{tpu_custom_call.1} parent=5 // pred_check
        _
      $region46: #{tpu_custom_call.1} parent=5 // pred_check_branch
        %264 = sbr.rel (%p261) target = $region48
      $region47: #{tpu_custom_call.1} parent=5 // pred_region
        %s265 = ssub.s32 %s16, 1
        %p266 = scmp.lt.s32.totalorder %s25, 1
        %s267 = scalar_select %p266, %s25, 1
        %p268 = scmp.lt.s32.totalorder %s26, 0
        %s269 = scalar_select %p268, %s26, 0
        %s270 = smul.addr %s269, 2
        %s271 = smul.addr %s267, 2
        %s272 = sadd.s32 %s270, %s271
        %s273 = smul.addr %s272, 4
        %s274 = scalar_lea.vmem %s0, %s273
        %p275 = pneg %p56
        %p276 = pneg %p53
        %p277 = pneg %p77
        %p278 = pneg %p74
        %p279 = pneg %p98
        %p280 = pneg %p95
        %p281 = pneg %p119
        %p282 = pneg %p116
        %p283 = pneg %p140
        %p284 = pneg %p137
        %p285 = pneg %p161
        %p286 = pneg %p158
        %p287 = pneg %p182
        %p288 = pneg %p179
        %p289 = pneg %p210
        %p290 = pneg %p207
        %s291 = sand.u32 %s197, 1
        %s292 = scalar_lea.sflag [#allocation3], %s291
        %s293 = sand.u32 %s197, 1
        %s294 = smul.addr %s293, 8
        %s295 = scalar_lea.vmem [#allocation2], %s294
        %p296 = scmp.lt.s32.totalorder %s25, 1
        %s297 = scalar_select %p296, %s25, 1
        %p298 = scmp.lt.s32.totalorder %s26, 0
        %s299 = scalar_select %p298, %s26, 0
        %s300 = smul.addr %s299, 2
        %s301 = smul.addr %s297, 2
        %s302 = sadd.s32 %s300, %s301
        %s303 = smul.addr %s302, 4
        %s304 = scalar_lea.vmem %s0, %s303
        %v306 = vld [vmem:[%s304] sm:$0xff]
        %v308 = vcombine.high %v306, %v306
        %v310 = vpack.c.bf16 %v306, %v306
        %v311 = vpack.c.bf16 %v308, %v308
        %v314 = vrot.slane %v310, 6
        %v315 = vrot.slane %v311, 6
        %316 = vrot.lane.b32.xlu0 %v314, 127
        %v317 = vpop.permute.xlu0 %316
        %318 = vrot.lane.b32.xlu0 %v315, 127
        %v319 = vpop.permute.xlu0 %318
        %vm320 = vcmask 1039360
        %v321 = vsel %vm320, %v317, %v319
        %v322 = vrot.slane %v310, 4
        %v323 = vrot.slane %v311, 4
        %324 = vrot.lane.b32.xlu0 %v322, 126
        %v325 = vpop.permute.xlu0 %324
        %326 = vrot.lane.b32.xlu0 %v323, 126
        %v327 = vpop.permute.xlu0 %326
        %vm328 = vcmask 1031168
        %v329 = vsel %vm328, %v325, %v327
        %vm330 = vcmask 1041408
        %v333 = vsel %vm330, %v310, %v321
        %v336 = vsel %vm330, %v311, %v319
        %vm337 = vcmask 1043456
        %v339 = vsel %vm337, %v333, %v329
        %v341 = vsel %vm337, %v336, %v327
        %v342 = vld [vmem:[%s1] sm:$0xf]
        %v343 = vld [vmem:[%s2] sm:$0xff]
        %345 = vset.pattern.permute.xlu0 0
        %346 = vperm.xlu0 %345, %v343
        %v347 = vpop.permute.xlu0 %346
        %vm349 = vcmask 97280
        %v351 = vsel %vm349, %v342, 0
        %vm353 = vcmask 1045504
        %v354 = vsel %vm353, %v339, 0
        %v356 = vsel %vm353, %v341, 0
        %358 = vmatprep.subr.bf16.mxu0 %v356
        %359 = vmatpush1.bf16.msra.mxu0 %v354
        %360 = vmatprep.subr.bf16.mxu0 0
        %361 = vmatpush1.bf16.msra.mxu0 0
        %362 = vmatprep.subr.bf16.mxu0 0
        %363 = vmatpush1.bf16.msra.mxu0 0
        %364 = vmatprep.subr.bf16.mxu0 0
        %365 = vmatpush1.bf16.msra.mxu0 0
        %366 = vmatprep.subr.bf16.mxu0 0
        %367 = vmatpush1.bf16.msra.mxu0 0
        %368 = vmatprep.subr.bf16.mxu0 0
        %369 = vmatpush1.bf16.msra.mxu0 0
        %370 = vmatprep.subr.bf16.mxu0 0
        %371 = vmatpush1.bf16.msra.mxu0 0
        %372 = vmatprep.subr.bf16.mxu0 0
        %373 = vmatpush1.bf16.msra.mxu0 0
        %374 = vmatprep.subr.bf16.mxu0 0
        %375 = vmatpush1.bf16.msra.mxu0 0
        %376 = vmatprep.subr.bf16.mxu0 0
        %377 = vmatpush1.bf16.msra.mxu0 0
        %378 = vmatprep.subr.bf16.mxu0 0
        %379 = vmatpush1.bf16.msra.mxu0 0
        %380 = vmatprep.subr.bf16.mxu0 0
        %381 = vmatpush1.bf16.msra.mxu0 0
        %382 = vmatprep.subr.bf16.mxu0 0
        %383 = vmatpush1.bf16.msra.mxu0 0
        %384 = vmatprep.subr.bf16.mxu0 0
        %385 = vmatpush1.bf16.msra.mxu0 0
        %386 = vmatprep.subr.bf16.mxu0 0
        %387 = vmatpush1.bf16.msra.mxu0 0
        %388 = vmatprep.subr.bf16.mxu0 0
        %389 = vmatpush1.bf16.msra.mxu0 0
        %390 = vmatprep.mubr.bf16.mxu0 0
        %391 = vmatmul.mubr.bf16.gmra.mrb[0].mxu0 %v351
        %v392 = vpop.f32.mrb[0].mxu0
        %v393 = vadd.f32 %v347, %v392
        %v394 = vpop.f32.mrb[0].mxu0
        %v395 = vadd.f32 %v347, %v394
        %v396 = vpop.f32.mrb[0].mxu0
        %v397 = vpop.f32.mrb[0].mxu0
        %398 = vdwg.mxu0
        %v399 = vmax.f32 %v393, 0.0
        %v400 = vmax.f32 %v395, 0.0
        %v401 = vlaneseq
        %v402 = vand.u32 %v401, 127
        %v403 = vadd.s32 %v402, 128
        %s404 = smul.u32 %s26, 128
        %s405 = ssub.s32 2, %s404
        %v406 = vstv %s405
        %vm407 = vcmp.ge.s32.totalorder %v402, %v406
        %vm408 = vcmp.ge.s32.totalorder %v403, %v406
        %v409 = vsel %vm407, %v399, 0.0
        %v410 = vsel %vm408, %v400, 0.0
        %v411 = vpack.c.bf16 %v409, %v409
        %v412 = vpack.c.bf16 %v410, %v410
        %v415 = vrot.slane %v411, 4
        %v416 = vrot.slane %v412, 4
        %417 = vrot.lane.b32.xlu0 %v415, 127
        %v418 = vpop.permute.xlu0 %417
        %419 = vrot.lane.b32.xlu0 %v416, 127
        %v420 = vpop.permute.xlu0 %419
        %v421 = vsel %vm320, %v418, %v420
        %422 = vrot.lane.b32.xlu0 %v411, 126
        %v423 = vpop.permute.xlu0 %422
        %424 = vrot.lane.b32.xlu0 %v412, 126
        %v425 = vpop.permute.xlu0 %424
        %v426 = vsel %vm328, %v423, %v425
        %v429 = vsel %vm337, %v411, %v421
        %v431 = vld [vmem:[%s3] sm:$0xf]
        %v432 = vld [vmem:[%s4] sm:$0xff]
        %434 = vset.pattern.permute.xlu0 0
        %435 = vperm.xlu0 %434, %v432
        %v436 = vpop.permute.xlu0 %435
        %vm438 = vcmask 195584
        %v440 = vsel %vm438, %v431, 0
        %v443 = vsel %vm337, %v426, 0
        %445 = vmatprep.subr.bf16.mxu0 0
        %446 = vmatpush1.bf16.msra.mxu0 %v429
        %447 = vmatprep.subr.bf16.mxu0 0
        %448 = vmatpush1.bf16.msra.mxu0 %v443
        %449 = vmatprep.subr.bf16.mxu0 0
        %450 = vmatpush1.bf16.msra.mxu0 0
        %451 = vmatprep.subr.bf16.mxu0 0
        %452 = vmatpush1.bf16.msra.mxu0 0
        %453 = vmatprep.subr.bf16.mxu0 0
        %454 = vmatpush1.bf16.msra.mxu0 0
        %455 = vmatprep.subr.bf16.mxu0 0
        %456 = vmatpush1.bf16.msra.mxu0 0
        %457 = vmatprep.subr.bf16.mxu0 0
        %458 = vmatpush1.bf16.msra.mxu0 0
        %459 = vmatprep.subr.bf16.mxu0 0
        %460 = vmatpush1.bf16.msra.mxu0 0
        %461 = vmatprep.subr.bf16.mxu0 0
        %462 = vmatpush1.bf16.msra.mxu0 0
        %463 = vmatprep.subr.bf16.mxu0 0
        %464 = vmatpush1.bf16.msra.mxu0 0
        %465 = vmatprep.subr.bf16.mxu0 0
        %466 = vmatpush1.bf16.msra.mxu0 0
        %467 = vmatprep.subr.bf16.mxu0 0
        %468 = vmatpush1.bf16.msra.mxu0 0
        %469 = vmatprep.subr.bf16.mxu0 0
        %470 = vmatpush1.bf16.msra.mxu0 0
        %471 = vmatprep.subr.bf16.mxu0 0
        %472 = vmatpush1.bf16.msra.mxu0 0
        %473 = vmatprep.subr.bf16.mxu0 0
        %474 = vmatpush1.bf16.msra.mxu0 0
        %475 = vmatprep.subr.bf16.mxu0 0
        %476 = vmatpush1.bf16.msra.mxu0 0
        %477 = vmatprep.mubr.bf16.mxu0 0
        %478 = vmatmul.mubr.bf16.gmra.mrb[0].mxu0 %v440
        %v479 = vpop.f32.mrb[0].mxu0
        %v480 = vadd.f32 %v436, %v479
        %v481 = vpop.f32.mrb[0].mxu0
        %v482 = vpop.f32.mrb[0].mxu0
        %v483 = vpop.f32.mrb[0].mxu0
        %484 = vdwg.mxu0
        %v485 = vmax.f32 %v480, 0.0
        %v486 = vld [vmem:[%s5] sm:$0xf]
        %v487 = vld [vmem:[%s6] sm:$0xff]
        %489 = vset.pattern.permute.xlu0 0
        %490 = vperm.xlu0 %489, %v487
        %v491 = vpop.permute.xlu0 %490
        %493 = vrot.lane.b32.xlu0 %v310, 124
        %v494 = vpop.permute.xlu0 %493
        %495 = vrot.lane.b32.xlu0 %v311, 124
        %v496 = vpop.permute.xlu0 %495
        %vm497 = vcmask 1014784
        %v498 = vsel %vm497, %v494, %v496
        %vm499 = vcmask 31744
        %v501 = vsel %vm499, %v486, 0
        %v504 = vsel %vm330, %v498, 0
        %506 = vmatprep.subr.bf16.mxu0 0
        %507 = vmatpush1.bf16.msra.mxu0 %v504
        %508 = vmatprep.subr.bf16.mxu0 0
        %509 = vmatpush1.bf16.msra.mxu0 0
        %510 = vmatprep.subr.bf16.mxu0 0
        %511 = vmatpush1.bf16.msra.mxu0 0
        %512 = vmatprep.subr.bf16.mxu0 0
        %513 = vmatpush1.bf16.msra.mxu0 0
        %514 = vmatprep.subr.bf16.mxu0 0
        %515 = vmatpush1.bf16.msra.mxu0 0
        %516 = vmatprep.subr.bf16.mxu0 0
        %517 = vmatpush1.bf16.msra.mxu0 0
        %518 = vmatprep.subr.bf16.mxu0 0
        %519 = vmatpush1.bf16.msra.mxu0 0
        %520 = vmatprep.subr.bf16.mxu0 0
        %521 = vmatpush1.bf16.msra.mxu0 0
        %522 = vmatprep.subr.bf16.mxu0 0
        %523 = vmatpush1.bf16.msra.mxu0 0
        %524 = vmatprep.subr.bf16.mxu0 0
        %525 = vmatpush1.bf16.msra.mxu0 0
        %526 = vmatprep.subr.bf16.mxu0 0
        %527 = vmatpush1.bf16.msra.mxu0 0
        %528 = vmatprep.subr.bf16.mxu0 0
        %529 = vmatpush1.bf16.msra.mxu0 0
        %530 = vmatprep.subr.bf16.mxu0 0
        %531 = vmatpush1.bf16.msra.mxu0 0
        %532 = vmatprep.subr.bf16.mxu0 0
        %533 = vmatpush1.bf16.msra.mxu0 0
        %534 = vmatprep.subr.bf16.mxu0 0
        %535 = vmatpush1.bf16.msra.mxu0 0
        %536 = vmatprep.subr.bf16.mxu0 0
        %537 = vmatpush1.bf16.msra.mxu0 0
        %538 = vmatprep.mubr.bf16.mxu0 0
        %539 = vmatmul.mubr.bf16.gmra.mrb[0].mxu0 %v501
        %v540 = vpop.f32.mrb[0].mxu0
        %v541 = vadd.f32 %v491, %v540
        %v542 = vpop.f32.mrb[0].mxu0
        %v543 = vpop.f32.mrb[0].mxu0
        %v544 = vpop.f32.mrb[0].mxu0
        %545 = vdwg.mxu0
        %v546 = vadd.f32 %v485, %v541
        %v547 = vmax.f32 %v546, 0.0
        %548 = vst [vmem:[%s295] sm:$0xff] %v547
        %s549 = sand.u32 %s197, 1
        %s550 = scalar_lea.sflag [#allocation3], %s549
        %s551 = sand.u32 %s197, 1
        %s552 = smul.addr %s551, 8
        %s553 = scalar_lea.vmem [#allocation2], %s552
        // Predicated region
        $region49: #{tpu_custom_call.1} parent=47 // pred_check
          %p554 = pneg %p207
        $region50: #{tpu_custom_call.1} parent=47 // pred_check_branch
          %556 = sbr.rel (%p554) target = $region52
        $region51: #{tpu_custom_call.1} parent=47 // pred_region
          %s558 = ssub.s32 128, 128
          %559 = vsyncadd %s550, %s558
          %s560 = sadd.s32 %s26, %s25
          %s561 = smul.addr %s560, 128
          %s562 = scalar_lea.hbm %s7, %s561
          %s564 = sshll.u32 %s553, 4
          %s565 = int_to_ptr.vmem [resolvable:$true] %s564
          %567 = dma.vmem_to_hbm [thread:$0]  %s565, 128, %s562, %s550
        $region52: #{tpu_custom_call.1} parent=47 // pred_fallthru
          _
      $region48: #{tpu_custom_call.1} parent=5 // pred_fallthru
        _
      %p568 = scmp.le.s32.totalorder 2, %s16
      // Predicated region
      $region53: #{tpu_custom_call.1} parent=5 // pred_check
        %p569 = pneg %p568
      $region54: #{tpu_custom_call.1} parent=5 // pred_check_branch
        %571 = sbr.rel (%p569) target = $region56
      $region55: #{tpu_custom_call.1} parent=5 // pred_region
        %s572 = ssub.s32 %s16, 2
        // Predicated region
        $region57: #{tpu_custom_call.1} parent=55 // pred_check
          %p573 = pneg %p213
        $region58: #{tpu_custom_call.1} parent=55 // pred_check_branch
          %575 = sbr.rel (%p573) target = $region60
        $region59: #{tpu_custom_call.1} parent=55 // pred_region
          %s576 = sand.u32 %s198, 1
          %s577 = scalar_lea.sflag [#allocation3], %s576
          %s578 = sand.u32 %s198, 1
          %s579 = smul.addr %s578, 8
          %s580 = scalar_lea.vmem [#allocation2], %s579
          %581 = dma.done %s577, 128
        $region60: #{tpu_custom_call.1} parent=55 // pred_fallthru
          _
      $region56: #{tpu_custom_call.1} parent=5 // pred_fallthru
        _
    $region6: #{tpu_custom_call.1} parent=1 // loop_footer
      %s20 = sadd.s32 1, %s16
    $region7: #{tpu_custom_call.1} parent=1 // loop_footer_branch
      %15 = sbr.rel target = $region3
    $region8: #{tpu_custom_call.1} parent=1 // loop_exit
      _
    %582 = vsyncpa [#allocation3], 1
    %s583 = scalar_lea.sflag [#allocation3], 1
    %584 = vsyncpa %s583, 1

</llo_original>
